<compile_context>
chip_gen: v5e
topology: v5e:2x2
jax: 0.10.0
libtpu: 0.0.40
codegen_flags: <defaults>
</compile_context>

<pallas_src>
import math
from functools import partial

import jax
import jax.numpy as jnp
from jax.experimental import pallas as pl
from jax.experimental.pallas import tpu as pltpu


# ----------------------------------------------------------------------------- helpers

def _round_up(x, m):
    return ((x + m - 1) // m) * m


def _cdiv(a, b):
    return (a + b - 1) // b


def _stable_sigmoid(v):
    # exp on EUP + approx reciprocal on EUP; no inf intermediate for large |v|.
    z = jnp.exp(-jnp.abs(v))
    num = jnp.where(v >= 0, 1.0, z)
    return num * pl.reciprocal(1.0 + z, approx=True)


# ----------------------------------------------------------------------------- Pallas kernels

def _conv_mm_kernel(activation, w_ref, p_ref, b_ref, o_ref):
    """One M-tile of:  out_T = act( W_T @ patches_T + bias )   (eval-BN folded into W/bias).

    w_ref: (Cout, K) bf16, p_ref: (K, tm) bf16, b_ref: (Cout, 1) f32, o_ref: (Cout, tm).
    Lane dim of the output is the M tile (dense); Cout stays un-padded on sublanes.
    """
    acc = jnp.dot(w_ref[...], p_ref[...], preferred_element_type=jnp.float32)
    y = acc + b_ref[...]
    if activation in ("silu", "silu_sigmoid"):
        y = y * _stable_sigmoid(y)
    if activation in ("sigmoid", "silu_sigmoid"):
        y = _stable_sigmoid(y)
    o_ref[...] = y.astype(o_ref.dtype)


def fused_conv_matmul(patches_t, w_t, bias_col, activation, out_dtype):
    """patches_t (K, M) bf16, w_t (Cout, K) bf16, bias_col (Cout, 1) f32 -> (Cout, M) out_dtype.

    - M (the lane dim) is tiled and software-pipelined; the grid axis is "parallel".
    - Cout is never padded (weight/output blocks use the full array dim on sublanes).
    - small M: one full block (no padding, no post-slice); large M: >=2 tiles of <=2048.
    """
    K, M = patches_t.shape
    cout = w_t.shape[0]

    if M <= 512:
        tm, mp = M, M                               # single block; lane dim == full array dim
    else:
        n_tiles = max(2, _cdiv(M, 2048))            # >=2 tiles so v7x's two TCs both get work
        tm = min(2048, _round_up(_cdiv(M, n_tiles), 128))
        mp = _round_up(M, tm)

    p = patches_t if mp == M else jnp.pad(patches_t, ((0, 0), (0, mp - M)))

    n_act = {"silu": 2, "sigmoid": 2, "silu_sigmoid": 4}.get(activation, 0)
    out_bytes = jnp.dtype(out_dtype).itemsize
    cost = pl.CostEstimate(
        flops=2 * cout * K * mp,
        transcendentals=n_act * cout * mp,
        bytes_accessed=(cout * K + K * mp) * 2 + cout * 4 + cout * mp * out_bytes,
    )

    out = pl.pallas_call(
        partial(_conv_mm_kernel, activation),
        out_shape=jax.ShapeDtypeStruct((cout, mp), out_dtype),
        grid=(mp // tm,),
        in_specs=[
            pl.BlockSpec((cout, K), lambda i: (0, 0)),   # full weight resident (tiny)
            pl.BlockSpec((K, tm), lambda i: (0, i)),     # K un-tiled (27..144), M pipelined
            pl.BlockSpec((cout, 1), lambda i: (0, 0)),
        ],
        out_specs=pl.BlockSpec((cout, tm), lambda i: (0, i)),
        compiler_params=pltpu.CompilerParams(
            dimension_semantics=("parallel",),           # shard M-tiles across v7x's 2 TCs
            vmem_limit_bytes=48 * 1024 * 1024,           # explicit; per-tile usage is tiny
        ),
        cost_estimate=cost,
    )(w_t, p, bias_col)
    # TODO(synk): pl.Buffered(1) on the constant-index weight/bias specs (minor VMEM saving).
    return out if mp == M else out[:, :M]


def _sigmoid_kernel(x_ref, o_ref):
    o_ref[...] = _stable_sigmoid(x_ref[...].astype(jnp.float32))


def pallas_sigmoid(x):
    """Lane-dense elementwise sigmoid (fallback; seg heads normally fuse it into the conv)."""
    shape = x.shape
    n = x.size
    rows = _round_up(_cdiv(n, 128), 8)
    tr = min(1024, rows)
    rows_p = _round_up(rows, tr)
    flat = jnp.pad(x.reshape(-1), (0, rows_p * 128 - n))
    x2d = flat.reshape(rows_p, 128)
    y = pl.pallas_call(
        _sigmoid_kernel,
        out_shape=jax.ShapeDtypeStruct((rows_p, 128), jnp.float32),
        grid=(rows_p // tr,),
        in_specs=[pl.BlockSpec((tr, 128), lambda i: (i, 0))],
        out_specs=pl.BlockSpec((tr, 128), lambda i: (i, 0)),
        compiler_params=pltpu.CompilerParams(dimension_semantics=("parallel",)),
    )(x2d)
    return y.reshape(-1)[:n].reshape(shape)


# ----------------------------------------------------------------------------- glue: im2col

def im2col_t(x, kh, kw, stride, pad):
    """x: (C, N, H, W) -> patches_T (K=kh*kw*C, M=N*OH*OW), K order (kh, kw, c)."""
    # TODO(synk): implicit GEMM -- build the shifted windows inside the kernel (halo DMA) to
    #             avoid the ~9x HBM inflation of materialized im2col for 3x3 convs.
    C, N, H, W = x.shape
    if kh == 1 and kw == 1 and stride == 1 and pad == 0:
        return x.reshape(C, N * H * W), H, W
    xp = jnp.pad(x, ((0, 0), (0, 0), (pad, pad), (pad, pad)))
    OH = (H + 2 * pad - kh) // stride + 1
    OW = (W + 2 * pad - kw) // stride + 1
    rows = []
    for i in range(kh):
        for j in range(kw):
            win = xp[:, :, i:i + stride * OH:stride, j:j + stride * OW:stride]
            rows.append(win.reshape(C, N * OH * OW))
    return jnp.concatenate(rows, axis=0), OH, OW


# ----------------------------------------------------------------------------- blocks

class Conv:
    """YOLOP Conv block: Conv2d(c1, c2, k, s, pad=k//2, bias=False) + BatchNorm2d(eps=1e-3) + SiLU.
    Eval-mode BN folded into the conv weight/bias at construction; weight stored bf16 (Cout, K)."""

    def __init__(self, key, c1, c2, k=1, s=1):
        self.c1, self.c2, self.k, self.s = c1, c2, k, s
        fan_in = c1 * k * k
        w = jax.random.normal(key, (c2, c1, k, k), jnp.float32) * math.sqrt(2.0 / fan_in)
        # (Cout, Cin, KH, KW) -> (Cout, KH, KW, Cin) -> (Cout, K); K order (kh, kw, cin)
        w_t = jnp.transpose(w, (0, 2, 3, 1)).reshape(c2, k * k * c1)
        eps = 1e-3                                    # initialize_weights(): bn.eps = 1e-3
        gamma, beta, mean, var = 1.0, 0.0, 0.0, 1.0   # untrained eval-mode BN stats
        scale = gamma / math.sqrt(var + eps)
        shift = beta - mean * scale
        self.w_t = (w_t * scale).astype(jnp.bfloat16)        # BN folded, cast once
        self.bias = jnp.full((c2, 1), shift, jnp.float32)    # conv bias=False -> only BN shift
        self.fuse_sigmoid = False                     # set by MCnet for seg-output layers
        self.out_f32 = False                          # set by MCnet for network outputs

    def activation(self):
        return "silu_sigmoid" if self.fuse_sigmoid else "silu"

    def out_dtype(self):
        return jnp.float32 if self.out_f32 else jnp.bfloat16

    def __call__(self, x):                            # x: (C, N, H, W) bf16
        n = x.shape[1]
        pt, oh, ow = im2col_t(x, self.k, self.k, self.s, self.k // 2)
        y = fused_conv_matmul(pt, self.w_t, self.bias, self.activation(), self.out_dtype())
        return y.reshape(self.c2, n, oh, ow)


class Concat:
    def __init__(self, dimension=1):
        assert dimension == 1          # PyTorch NCHW channel dim == internal (C,N,H,W) axis 0
        self.d = dimension

    def __call__(self, xs):
        return jnp.concatenate(xs, axis=0)


class Upsample:
    def __init__(self, size=None, scale_factor=2, mode="nearest"):
        assert mode == "nearest"
        self.sf = int(scale_factor)

    def __call__(self, x):             # (C, N, H, W) -> one broadcast+reshape pass
        # TODO(synk): fold the x2 nearest upsample into the following conv's patch gather.
        c, n, h, w = x.shape
        sf = self.sf
        y = jnp.broadcast_to(x[:, :, :, None, :, None], (c, n, h, sf, w, sf))
        return y.reshape(c, n, h * sf, w * sf)


class Detect:
    """YOLO Detect head, training-mode output: list of (N, na, ny, nx, no) tensors."""

    def __init__(self, key, nc, anchors, ch):
        self.nc = nc
        self.no = nc + 5
        self.nl = len(anchors)
        self.na = len(anchors[0]) // 2
        self.anchors = jnp.asarray(anchors, jnp.float32).reshape(self.nl, -1, 2)
        self.stride = None
        self.w, self.b = [], []
        keys = jax.random.split(key, self.nl)
        for kk, c in zip(keys, ch):
            w = jax.random.normal(kk, (self.na * self.no, c), jnp.float32) * math.sqrt(2.0 / c)
            self.w.append(w.astype(jnp.bfloat16))              # (Cout, K) = (na*no, c)
            self.b.append(jnp.zeros((self.na * self.no,), jnp.float32))

    def __call__(self, xs):            # xs: list of (C, N, H, W) bf16 tensors
        outs = []
        for i, x in enumerate(xs):
            c, n, h, w = x.shape
            pt = x.reshape(c, n * h * w)                       # 1x1 conv == plain matmul
            y = fused_conv_matmul(pt, self.w[i], self.b[i].reshape(-1, 1), None, jnp.float32)
            y = y.reshape(self.na, self.no, n, h, w)
            # matches PyTorch .view(bs, na, no, ny, nx).permute(0, 1, 3, 4, 2)
            outs.append(jnp.transpose(y, (2, 0, 3, 4, 1)))
        return outs


_BLOCKS = {"Conv": Conv, "Concat": Concat, "Upsample": Upsample, "Detect": Detect}


# ----------------------------------------------------------------------------- MCnet

class MCnet:
    def __init__(self, block_cfg, export=False):
        self.nc = 13
        self.detector_index = -1
        self.det_out_idx = block_cfg[0][0]
        self.seg_out_idx = block_cfg[0][1:]
        self.export = export

        layers, save = [], []
        blocks = block_cfg[1:]
        keys = jax.random.split(jax.random.PRNGKey(42), len(blocks))
        for i, (from_, name, args) in enumerate(blocks):
            cls = _BLOCKS[name]
            if cls in (Conv, Detect):
                block_ = cls(keys[i], *args)
            else:
                block_ = cls(*args)
            if cls is Detect:
                self.detector_index = i
            block_.index, block_.from_ = i, from_
            layers.append(block_)
            save.extend(x % i for x in ([from_] if isinstance(from_, int) else from_) if x != -1)
        assert self.detector_index == block_cfg[0][0]
        self.model, self.save = layers, sorted(set(save))
        self.names = [str(i) for i in range(self.nc)]

        # Network-output convs emit f32; the seg sigmoid is fused into the last conv kernel when
        # safe (raw output not reused downstream and not export mode).
        for idx in self.seg_out_idx:
            blk = self.model[idx]
            if isinstance(blk, Conv):
                blk.out_f32 = True
                if not self.export and idx not in self.save:
                    blk.fuse_sigmoid = True

        # Merge sibling Conv heads that read the same cached tensor with identical geometry
        # (layers 5 & 9 both read layer 2): one im2col + one pallas_call, channel-sliced after.
        self._build_sibling_groups()

        # stride probe: PyTorch runs forward(torch.zeros(1,3,256,256)); we use jax.eval_shape
        # (identical shape propagation, no device compute).
        detector = self.model[self.detector_index]
        s = 256
        probe = jax.eval_shape(self.forward, jax.ShapeDtypeStruct((1, 3, s, s), jnp.float32))
        detects = probe[0]
        detector.stride = jnp.array([s / d.shape[-2] for d in detects], jnp.float32)
        detector.anchors = detector.anchors / detector.stride.reshape(-1, 1, 1)
        # TODO(synk): check_anchor_order is a no-op for a single detection level; not translated.
        self.stride = detector.stride
        self._initialize_biases()

    def _build_sibling_groups(self):
        groups = {}
        for i, blk in enumerate(self.model):
            if isinstance(blk, Conv) and isinstance(blk.from_, int) and blk.from_ != -1:
                key = (blk.from_, blk.c1, blk.k, blk.s, blk.fuse_sigmoid, blk.out_f32)
                groups.setdefault(key, []).append(i)
        self._merged = {}          # layer idx -> (group key, ch_lo, ch_hi)
        self._merged_params = {}   # group key -> (w_t, bias, activation, out_dtype, k, s)
        for key, idxs in groups.items():
            if len(idxs) < 2:
                continue
            w_t = jnp.concatenate([self.model[i].w_t for i in idxs], axis=0)
            bias = jnp.concatenate([self.model[i].bias for i in idxs], axis=0)
            blk0 = self.model[idxs[0]]
            self._merged_params[key] = (w_t, bias, blk0.activation(), blk0.out_dtype(),
                                        blk0.k, blk0.s)
            off = 0
            for i in idxs:
                c2 = self.model[i].c2
                self._merged[i] = (key, off, off + c2)
                off += c2

    def _run_merged(self, key, x):
        w_t, bias, act, out_dtype, k, s = self._merged_params[key]
        n = x.shape[1]
        pt, oh, ow = im2col_t(x, k, k, s, k // 2)
        y = fused_conv_matmul(pt, w_t, bias, act, out_dtype)
        return y.reshape(w_t.shape[0], n, oh, ow)

    def _initialize_biases(self, cf=None):
        m = self.model[self.detector_index]
        new_b = []
        for bi, s in zip(m.b, m.stride):
            b = bi.reshape(m.na, -1)
            b = b.at[:, 4].add(math.log(8.0 / (416.0 / float(s)) ** 2))
            b = b.at[:, 5:].add(math.log(0.6 / (m.nc - 0.99)) if cf is None else 0.0)
            new_b.append(b.reshape(-1))
        m.b = new_b

    def forward(self, x_nchw):
        # NCHW f32 -> internal channels-first (C, N, H, W) bf16; cast exactly once.
        x = jnp.transpose(x_nchw, (1, 0, 2, 3)).astype(jnp.bfloat16)
        cache, out, det_out = [], [], None
        merged_results = {}
        for i, block in enumerate(self.model):
            if block.from_ != -1:
                x = cache[block.from_] if isinstance(block.from_, int) else \
                    [x if j == -1 else cache[j] for j in block.from_]
            if i in self._merged:
                gkey, lo, hi = self._merged[i]
                if gkey not in merged_results:
                    merged_results[gkey] = self._run_merged(gkey, x)
                x = merged_results[gkey][lo:hi]          # cheap leading-axis channel slice
            else:
                x = block(x)
            if i in self.seg_out_idx:
                if self.export:
                    out.append(x)
                elif isinstance(block, Conv) and block.fuse_sigmoid:
                    out.append(x)                        # sigmoid already fused into the conv
                else:
                    out.append(pallas_sigmoid(x))
            if i == self.detector_index:
                det_out = x
            cache.append(x if block.index in self.save else None)
        out.insert(0, det_out)
        # seg maps back to PyTorch NCHW; det_out already has PyTorch shape (N, na, ny, nx, no)
        return [out[0]] + [jnp.transpose(o, (1, 0, 2, 3)) for o in out[1:]]


# Synthetic YOLOP-like config:  header = [detector_index, seg_out_idx...]
BLOCK_CFG = [
    [4, 8, 12],
    [-1,      "Conv",     [3, 8, 3, 2]],                        # 0  backbone /2
    [-1,      "Conv",     [8, 16, 3, 2]],                       # 1  backbone /4
    [-1,      "Conv",     [16, 16, 3, 1]],                      # 2
    [[-1, 1], "Concat",   [1]],                                 # 3  neck concat -> 32 ch
    [[-1],    "Detect",   [13, [[10, 13, 16, 30, 33, 23]], [32]]],  # 4  detect head
    [2,       "Conv",     [16, 8, 3, 1]],                       # 5  drivable-area seg branch
    [-1,      "Upsample", [None, 2, "nearest"]],                # 6
    [-1,      "Conv",     [8, 8, 3, 1]],                        # 7
    [-1,      "Conv",     [8, 2, 3, 1]],                        # 8  seg out 1 (sigmoid, fused)
    [2,       "Conv",     [16, 8, 3, 1]],                       # 9  lane-line seg branch
    [-1,      "Upsample", [None, 2, "nearest"]],                # 10
    [-1,      "Conv",     [8, 8, 3, 1]],                        # 11
    [-1,      "Conv",     [8, 2, 3, 1]],                        # 12 seg out 2 (sigmoid, fused)
]


if __name__ == "__main__":
    net = MCnet(BLOCK_CFG, export=False)
    x = jax.random.normal(jax.random.PRNGKey(0), (2, 3, 16, 16), jnp.float32)
    fwd = jax.jit(net.forward)
    outs = fwd(x)
    for leaf in jax.tree_util.tree_leaves(outs):
        jax.block_until_ready(leaf)
    det, seg_da, seg_ll = outs
    assert det[0].shape == (2, 3, 4, 4, 18)          # (N, na, ny, nx, no)
    assert seg_da.shape == (2, 2, 8, 8) and seg_ll.shape == (2, 2, 8, 8)
    print("KERNEL_OK")
</pallas_src>

<mosaic_0001>
module attributes {stable_mosaic.version = 11 : i64} {
  func.func @_conv_mm_kernel(%arg0: i32, %arg1: memref<8x27xbf16, #tpu.memory_space<vmem>>, %arg2: memref<27x128xbf16, #tpu.memory_space<vmem>>, %arg3: memref<8x1xf32, #tpu.memory_space<vmem>>, %arg4: memref<8x128xbf16, #tpu.memory_space<vmem>>) attributes {dimension_semantics = [#tpu.dimension_semantics<parallel>], iteration_bounds = array<i64: 1>, scalar_prefetch = 0 : i64, scratch_operands = 0 : i64, tpu.core_type = #tpu.core_type<tc>, window_params = [{pipeline_mode = #tpu.pipeline_mode<synchronous>, transform_indices = @transform_0, window_bounds = array<i64: 8, 27>}, {transform_indices = @transform_1, window_bounds = array<i64: 27, 128>}, {pipeline_mode = #tpu.pipeline_mode<synchronous>, transform_indices = @transform_2, window_bounds = array<i64: 8, 1>}, {transform_indices = @transform_3, window_bounds = array<i64: 8, 128>}]} {
    %c0 = arith.constant 0 : index
    %c0_0 = arith.constant 0 : index
    %0 = vector.load %arg1[%c0, %c0_0] : memref<8x27xbf16, #tpu.memory_space<vmem>>, vector<8x27xbf16>
    %c0_1 = arith.constant 0 : index
    %c0_2 = arith.constant 0 : index
    %1 = vector.load %arg2[%c0_1, %c0_2] : memref<27x128xbf16, #tpu.memory_space<vmem>>, vector<27x128xbf16>
    %cst = arith.constant dense<0.000000e+00> : vector<8x128xf32>
    %2 = tpu.matmul %0, %1, %cst {dimension_numbers = #tpu.dot_dimension_numbers<[1], [0], [0], [1], [0, 0, 1, 1], [], []>} : vector<8x27xbf16>, vector<27x128xbf16>, vector<8x128xf32> -> vector<8x128xf32>
    %c0_3 = arith.constant 0 : index
    %c0_4 = arith.constant 0 : index
    %3 = vector.load %arg3[%c0_3, %c0_4] : memref<8x1xf32, #tpu.memory_space<vmem>>, vector<8x1xf32>
    %4 = vector.broadcast %3 : vector<8x1xf32> to vector<8x128xf32>
    %5 = arith.addf %2, %4 : vector<8x128xf32>
    %6 = math.absf %5 : vector<8x128xf32>
    %cst_5 = arith.constant 0.000000e+00 : f32
    %7 = vector.broadcast %cst_5 : f32 to vector<8x128xf32>
    %8 = arith.subf %7, %6 : vector<8x128xf32>
    %9 = math.exp %8 : vector<8x128xf32>
    %cst_6 = arith.constant 0.000000e+00 : f32
    %10 = vector.broadcast %cst_6 : f32 to vector<8x128xf32>
    %11 = arith.cmpf oge, %5, %10 : vector<8x128xf32>
    %cst_7 = arith.constant 1.000000e+00 : f32
    %12 = vector.broadcast %cst_7 : f32 to vector<8x128xf32>
    %13 = arith.select %11, %12, %9 : vector<8x128xi1>, vector<8x128xf32>
    %cst_8 = arith.constant 1.000000e+00 : f32
    %14 = vector.broadcast %cst_8 : f32 to vector<8x128xf32>
    %15 = arith.addf %14, %9 : vector<8x128xf32>
    %16 = tpu.reciprocal %15 {approx = true} : vector<8x128xf32> -> vector<8x128xf32>
    %17 = arith.mulf %13, %16 : vector<8x128xf32>
    %18 = arith.mulf %5, %17 : vector<8x128xf32>
    %19 = arith.truncf %18 : vector<8x128xf32> to vector<8x128xbf16>
    %c0_9 = arith.constant 0 : index
    %c0_10 = arith.constant 0 : index
    %20 = vector.load %arg4[%c0_9, %c0_10] : memref<8x128xbf16, #tpu.memory_space<vmem>>, vector<8x128xbf16>
    tpu.vector_store %arg4[%c0_9, %c0_10], %19 {strides = array<i32>} : memref<8x128xbf16, #tpu.memory_space<vmem>>, vector<8x128xbf16>,
    return
  }
  func.func @transform_0(%arg0: i32) -> (i32, i32) {
    %c0_i32 = arith.constant 0 : i32
    %c0_i32_0 = arith.constant 0 : i32
    %c0_i32_1 = arith.constant 0 : i32
    return %c0_i32, %c0_i32_0 : i32, i32
  }
  func.func @transform_1(%arg0: i32) -> (i32, i32) {
    %c0_i32 = arith.constant 0 : i32
    %c0_i32_0 = arith.constant 0 : i32
    return %c0_i32, %arg0 : i32, i32
  }
  func.func @transform_2(%arg0: i32) -> (i32, i32) {
    %c0_i32 = arith.constant 0 : i32
    %c0_i32_0 = arith.constant 0 : i32
    %c0_i32_1 = arith.constant 0 : i32
    return %c0_i32, %c0_i32_0 : i32, i32
  }
  func.func @transform_3(%arg0: i32) -> (i32, i32) {
    %c0_i32 = arith.constant 0 : i32
    %c0_i32_0 = arith.constant 0 : i32
    return %c0_i32, %arg0 : i32, i32
  }
}

module attributes {stable_mosaic.version = 11 : i64} {
  func.func @_conv_mm_kernel(%arg0: i32, %arg1: memref<16x72xbf16, #tpu.memory_space<vmem>>, %arg2: memref<72x32xbf16, #tpu.memory_space<vmem>>, %arg3: memref<16x1xf32, #tpu.memory_space<vmem>>, %arg4: memref<16x32xbf16, #tpu.memory_space<vmem>>) attributes {dimension_semantics = [#tpu.dimension_semantics<parallel>], iteration_bounds = array<i64: 1>, scalar_prefetch = 0 : i64, scratch_operands = 0 : i64, tpu.core_type = #tpu.core_type<tc>, window_params = [{pipeline_mode = #tpu.pipeline_mode<synchronous>, transform_indices = @transform_0, window_bounds = array<i64: 16, 72>}, {transform_indices = @transform_1, window_bounds = array<i64: 72, 32>}, {pipeline_mode = #tpu.pipeline_mode<synchronous>, transform_indices = @transform_2, window_bounds = array<i64: 16, 1>}, {transform_indices = @transform_3, window_bounds = array<i64: 16, 32>}]} {
    %c0 = arith.constant 0 : index
    %c0_0 = arith.constant 0 : index
    %0 = vector.load %arg1[%c0, %c0_0] : memref<16x72xbf16, #tpu.memory_space<vmem>>, vector<16x72xbf16>
    %c0_1 = arith.constant 0 : index
    %c0_2 = arith.constant 0 : index
    %1 = vector.load %arg2[%c0_1, %c0_2] : memref<72x32xbf16, #tpu.memory_space<vmem>>, vector<72x32xbf16>
    %cst = arith.constant dense<0.000000e+00> : vector<16x32xf32>
    %2 = tpu.matmul %0, %1, %cst {dimension_numbers = #tpu.dot_dimension_numbers<[1], [0], [0], [1], [0, 0, 1, 1], [], []>} : vector<16x72xbf16>, vector<72x32xbf16>, vector<16x32xf32> -> vector<16x32xf32>
    %c0_3 = arith.constant 0 : index
    %c0_4 = arith.constant 0 : index
    %3 = vector.load %arg3[%c0_3, %c0_4] : memref<16x1xf32, #tpu.memory_space<vmem>>, vector<16x1xf32>
    %4 = vector.broadcast %3 : vector<16x1xf32> to vector<16x32xf32>
    %5 = arith.addf %2, %4 : vector<16x32xf32>
    %6 = math.absf %5 : vector<16x32xf32>
    %cst_5 = arith.constant 0.000000e+00 : f32
    %7 = vector.broadcast %cst_5 : f32 to vector<16x32xf32>
    %8 = arith.subf %7, %6 : vector<16x32xf32>
    %9 = math.exp %8 : vector<16x32xf32>
    %cst_6 = arith.constant 0.000000e+00 : f32
    %10 = vector.broadcast %cst_6 : f32 to vector<16x32xf32>
    %11 = arith.cmpf oge, %5, %10 : vector<16x32xf32>
    %cst_7 = arith.constant 1.000000e+00 : f32
    %12 = vector.broadcast %cst_7 : f32 to vector<16x32xf32>
    %13 = arith.select %11, %12, %9 : vector<16x32xi1>, vector<16x32xf32>
    %cst_8 = arith.constant 1.000000e+00 : f32
    %14 = vector.broadcast %cst_8 : f32 to vector<16x32xf32>
    %15 = arith.addf %14, %9 : vector<16x32xf32>
    %16 = tpu.reciprocal %15 {approx = true} : vector<16x32xf32> -> vector<16x32xf32>
    %17 = arith.mulf %13, %16 : vector<16x32xf32>
    %18 = arith.mulf %5, %17 : vector<16x32xf32>
    %19 = arith.truncf %18 : vector<16x32xf32> to vector<16x32xbf16>
    %c0_9 = arith.constant 0 : index
    %c0_10 = arith.constant 0 : index
    %20 = vector.load %arg4[%c0_9, %c0_10] : memref<16x32xbf16, #tpu.memory_space<vmem>>, vector<16x32xbf16>
    tpu.vector_store %arg4[%c0_9, %c0_10], %19 {strides = array<i32>} : memref<16x32xbf16, #tpu.memory_space<vmem>>, vector<16x32xbf16>,
    return
  }
  func.func @transform_0(%arg0: i32) -> (i32, i32) {
    %c0_i32 = arith.constant 0 : i32
    %c0_i32_0 = arith.constant 0 : i32
    %c0_i32_1 = arith.constant 0 : i32
    return %c0_i32, %c0_i32_0 : i32, i32
  }
  func.func @transform_1(%arg0: i32) -> (i32, i32) {
    %c0_i32 = arith.constant 0 : i32
    %c0_i32_0 = arith.constant 0 : i32
    return %c0_i32, %arg0 : i32, i32
  }
  func.func @transform_2(%arg0: i32) -> (i32, i32) {
    %c0_i32 = arith.constant 0 : i32
    %c0_i32_0 = arith.constant 0 : i32
    %c0_i32_1 = arith.constant 0 : i32
    return %c0_i32, %c0_i32_0 : i32, i32
  }
  func.func @transform_3(%arg0: i32) -> (i32, i32) {
    %c0_i32 = arith.constant 0 : i32
    %c0_i32_0 = arith.constant 0 : i32
    return %c0_i32, %arg0 : i32, i32
  }
}

module attributes {stable_mosaic.version = 11 : i64} {
  func.func @_conv_mm_kernel(%arg0: i32, %arg1: memref<16x144xbf16, #tpu.memory_space<vmem>>, %arg2: memref<144x32xbf16, #tpu.memory_space<vmem>>, %arg3: memref<16x1xf32, #tpu.memory_space<vmem>>, %arg4: memref<16x32xbf16, #tpu.memory_space<vmem>>) attributes {dimension_semantics = [#tpu.dimension_semantics<parallel>], iteration_bounds = array<i64: 1>, scalar_prefetch = 0 : i64, scratch_operands = 0 : i64, tpu.core_type = #tpu.core_type<tc>, window_params = [{pipeline_mode = #tpu.pipeline_mode<synchronous>, transform_indices = @transform_0, window_bounds = array<i64: 16, 144>}, {transform_indices = @transform_1, window_bounds = array<i64: 144, 32>}, {pipeline_mode = #tpu.pipeline_mode<synchronous>, transform_indices = @transform_2, window_bounds = array<i64: 16, 1>}, {transform_indices = @transform_3, window_bounds = array<i64: 16, 32>}]} {
    %c0 = arith.constant 0 : index
    %c0_0 = arith.constant 0 : index
    %0 = vector.load %arg1[%c0, %c0_0] : memref<16x144xbf16, #tpu.memory_space<vmem>>, vector<16x144xbf16>
    %c0_1 = arith.constant 0 : index
    %c0_2 = arith.constant 0 : index
    %1 = vector.load %arg2[%c0_1, %c0_2] : memref<144x32xbf16, #tpu.memory_space<vmem>>, vector<144x32xbf16>
    %cst = arith.constant dense<0.000000e+00> : vector<16x32xf32>
    %2 = tpu.matmul %0, %1, %cst {dimension_numbers = #tpu.dot_dimension_numbers<[1], [0], [0], [1], [0, 0, 1, 1], [], []>} : vector<16x144xbf16>, vector<144x32xbf16>, vector<16x32xf32> -> vector<16x32xf32>
    %c0_3 = arith.constant 0 : index
    %c0_4 = arith.constant 0 : index
    %3 = vector.load %arg3[%c0_3, %c0_4] : memref<16x1xf32, #tpu.memory_space<vmem>>, vector<16x1xf32>
    %4 = vector.broadcast %3 : vector<16x1xf32> to vector<16x32xf32>
    %5 = arith.addf %2, %4 : vector<16x32xf32>
    %6 = math.absf %5 : vector<16x32xf32>
    %cst_5 = arith.constant 0.000000e+00 : f32
    %7 = vector.broadcast %cst_5 : f32 to vector<16x32xf32>
    %8 = arith.subf %7, %6 : vector<16x32xf32>
    %9 = math.exp %8 : vector<16x32xf32>
    %cst_6 = arith.constant 0.000000e+00 : f32
    %10 = vector.broadcast %cst_6 : f32 to vector<16x32xf32>
    %11 = arith.cmpf oge, %5, %10 : vector<16x32xf32>
    %cst_7 = arith.constant 1.000000e+00 : f32
    %12 = vector.broadcast %cst_7 : f32 to vector<16x32xf32>
    %13 = arith.select %11, %12, %9 : vector<16x32xi1>, vector<16x32xf32>
    %cst_8 = arith.constant 1.000000e+00 : f32
    %14 = vector.broadcast %cst_8 : f32 to vector<16x32xf32>
    %15 = arith.addf %14, %9 : vector<16x32xf32>
    %16 = tpu.reciprocal %15 {approx = true} : vector<16x32xf32> -> vector<16x32xf32>
    %17 = arith.mulf %13, %16 : vector<16x32xf32>
    %18 = arith.mulf %5, %17 : vector<16x32xf32>
    %19 = arith.truncf %18 : vector<16x32xf32> to vector<16x32xbf16>
    %c0_9 = arith.constant 0 : index
    %c0_10 = arith.constant 0 : index
    %20 = vector.load %arg4[%c0_9, %c0_10] : memref<16x32xbf16, #tpu.memory_space<vmem>>, vector<16x32xbf16>
    tpu.vector_store %arg4[%c0_9, %c0_10], %19 {strides = array<i32>} : memref<16x32xbf16, #tpu.memory_space<vmem>>, vector<16x32xbf16>,
    return
  }
  func.func @transform_0(%arg0: i32) -> (i32, i32) {
    %c0_i32 = arith.constant 0 : i32
    %c0_i32_0 = arith.constant 0 : i32
    %c0_i32_1 = arith.constant 0 : i32
    return %c0_i32, %c0_i32_0 : i32, i32
  }
  func.func @transform_1(%arg0: i32) -> (i32, i32) {
    %c0_i32 = arith.constant 0 : i32
    %c0_i32_0 = arith.constant 0 : i32
    return %c0_i32, %arg0 : i32, i32
  }
  func.func @transform_2(%arg0: i32) -> (i32, i32) {
    %c0_i32 = arith.constant 0 : i32
    %c0_i32_0 = arith.constant 0 : i32
    %c0_i32_1 = arith.constant 0 : i32
    return %c0_i32, %c0_i32_0 : i32, i32
  }
  func.func @transform_3(%arg0: i32) -> (i32, i32) {
    %c0_i32 = arith.constant 0 : i32
    %c0_i32_0 = arith.constant 0 : i32
    return %c0_i32, %arg0 : i32, i32
  }
}

module attributes {stable_mosaic.version = 11 : i64} {
  func.func @_conv_mm_kernel(%arg0: i32, %arg1: memref<8x72xbf16, #tpu.memory_space<vmem>>, %arg2: memref<72x128xbf16, #tpu.memory_space<vmem>>, %arg3: memref<8x1xf32, #tpu.memory_space<vmem>>, %arg4: memref<8x128xbf16, #tpu.memory_space<vmem>>) attributes {dimension_semantics = [#tpu.dimension_semantics<parallel>], iteration_bounds = array<i64: 1>, scalar_prefetch = 0 : i64, scratch_operands = 0 : i64, tpu.core_type = #tpu.core_type<tc>, window_params = [{pipeline_mode = #tpu.pipeline_mode<synchronous>, transform_indices = @transform_0, window_bounds = array<i64: 8, 72>}, {transform_indices = @transform_1, window_bounds = array<i64: 72, 128>}, {pipeline_mode = #tpu.pipeline_mode<synchronous>, transform_indices = @transform_2, window_bounds = array<i64: 8, 1>}, {transform_indices = @transform_3, window_bounds = array<i64: 8, 128>}]} {
    %c0 = arith.constant 0 : index
    %c0_0 = arith.constant 0 : index
    %0 = vector.load %arg1[%c0, %c0_0] : memref<8x72xbf16, #tpu.memory_space<vmem>>, vector<8x72xbf16>
    %c0_1 = arith.constant 0 : index
    %c0_2 = arith.constant 0 : index
    %1 = vector.load %arg2[%c0_1, %c0_2] : memref<72x128xbf16, #tpu.memory_space<vmem>>, vector<72x128xbf16>
    %cst = arith.constant dense<0.000000e+00> : vector<8x128xf32>
    %2 = tpu.matmul %0, %1, %cst {dimension_numbers = #tpu.dot_dimension_numbers<[1], [0], [0], [1], [0, 0, 1, 1], [], []>} : vector<8x72xbf16>, vector<72x128xbf16>, vector<8x128xf32> -> vector<8x128xf32>
    %c0_3 = arith.constant 0 : index
    %c0_4 = arith.constant 0 : index
    %3 = vector.load %arg3[%c0_3, %c0_4] : memref<8x1xf32, #tpu.memory_space<vmem>>, vector<8x1xf32>
    %4 = vector.broadcast %3 : vector<8x1xf32> to vector<8x128xf32>
    %5 = arith.addf %2, %4 : vector<8x128xf32>
    %6 = math.absf %5 : vector<8x128xf32>
    %cst_5 = arith.constant 0.000000e+00 : f32
    %7 = vector.broadcast %cst_5 : f32 to vector<8x128xf32>
    %8 = arith.subf %7, %6 : vector<8x128xf32>
    %9 = math.exp %8 : vector<8x128xf32>
    %cst_6 = arith.constant 0.000000e+00 : f32
    %10 = vector.broadcast %cst_6 : f32 to vector<8x128xf32>
    %11 = arith.cmpf oge, %5, %10 : vector<8x128xf32>
    %cst_7 = arith.constant 1.000000e+00 : f32
    %12 = vector.broadcast %cst_7 : f32 to vector<8x128xf32>
    %13 = arith.select %11, %12, %9 : vector<8x128xi1>, vector<8x128xf32>
    %cst_8 = arith.constant 1.000000e+00 : f32
    %14 = vector.broadcast %cst_8 : f32 to vector<8x128xf32>
    %15 = arith.addf %14, %9 : vector<8x128xf32>
    %16 = tpu.reciprocal %15 {approx = true} : vector<8x128xf32> -> vector<8x128xf32>
    %17 = arith.mulf %13, %16 : vector<8x128xf32>
    %18 = arith.mulf %5, %17 : vector<8x128xf32>
    %19 = arith.truncf %18 : vector<8x128xf32> to vector<8x128xbf16>
    %c0_9 = arith.constant 0 : index
    %c0_10 = arith.constant 0 : index
    %20 = vector.load %arg4[%c0_9, %c0_10] : memref<8x128xbf16, #tpu.memory_space<vmem>>, vector<8x128xbf16>
    tpu.vector_store %arg4[%c0_9, %c0_10], %19 {strides = array<i32>} : memref<8x128xbf16, #tpu.memory_space<vmem>>, vector<8x128xbf16>,
    return
  }
  func.func @transform_0(%arg0: i32) -> (i32, i32) {
    %c0_i32 = arith.constant 0 : i32
    %c0_i32_0 = arith.constant 0 : i32
    %c0_i32_1 = arith.constant 0 : i32
    return %c0_i32, %c0_i32_0 : i32, i32
  }
  func.func @transform_1(%arg0: i32) -> (i32, i32) {
    %c0_i32 = arith.constant 0 : i32
    %c0_i32_0 = arith.constant 0 : i32
    return %c0_i32, %arg0 : i32, i32
  }
  func.func @transform_2(%arg0: i32) -> (i32, i32) {
    %c0_i32 = arith.constant 0 : i32
    %c0_i32_0 = arith.constant 0 : i32
    %c0_i32_1 = arith.constant 0 : i32
    return %c0_i32, %c0_i32_0 : i32, i32
  }
  func.func @transform_3(%arg0: i32) -> (i32, i32) {
    %c0_i32 = arith.constant 0 : i32
    %c0_i32_0 = arith.constant 0 : i32
    return %c0_i32, %arg0 : i32, i32
  }
}

module attributes {stable_mosaic.version = 11 : i64} {
  func.func @_conv_mm_kernel(%arg0: i32, %arg1: memref<2x72xbf16, #tpu.memory_space<vmem>>, %arg2: memref<72x128xbf16, #tpu.memory_space<vmem>>, %arg3: memref<2x1xf32, #tpu.memory_space<vmem>>, %arg4: memref<2x128xf32, #tpu.memory_space<vmem>>) attributes {dimension_semantics = [#tpu.dimension_semantics<parallel>], iteration_bounds = array<i64: 1>, scalar_prefetch = 0 : i64, scratch_operands = 0 : i64, tpu.core_type = #tpu.core_type<tc>, window_params = [{pipeline_mode = #tpu.pipeline_mode<synchronous>, transform_indices = @transform_0, window_bounds = array<i64: 2, 72>}, {transform_indices = @transform_1, window_bounds = array<i64: 72, 128>}, {pipeline_mode = #tpu.pipeline_mode<synchronous>, transform_indices = @transform_2, window_bounds = array<i64: 2, 1>}, {transform_indices = @transform_3, window_bounds = array<i64: 2, 128>}]} {
    %c0 = arith.constant 0 : index
    %c0_0 = arith.constant 0 : index
    %0 = vector.load %arg1[%c0, %c0_0] : memref<2x72xbf16, #tpu.memory_space<vmem>>, vector<2x72xbf16>
    %c0_1 = arith.constant 0 : index
    %c0_2 = arith.constant 0 : index
    %1 = vector.load %arg2[%c0_1, %c0_2] : memref<72x128xbf16, #tpu.memory_space<vmem>>, vector<72x128xbf16>
    %cst = arith.constant dense<0.000000e+00> : vector<2x128xf32>
    %2 = tpu.matmul %0, %1, %cst {dimension_numbers = #tpu.dot_dimension_numbers<[1], [0], [0], [1], [0, 0, 1, 1], [], []>} : vector<2x72xbf16>, vector<72x128xbf16>, vector<2x128xf32> -> vector<2x128xf32>
    %c0_3 = arith.constant 0 : index
    %c0_4 = arith.constant 0 : index
    %3 = vector.load %arg3[%c0_3, %c0_4] : memref<2x1xf32, #tpu.memory_space<vmem>>, vector<2x1xf32>
    %4 = vector.broadcast %3 : vector<2x1xf32> to vector<2x128xf32>
    %5 = arith.addf %2, %4 : vector<2x128xf32>
    %6 = math.absf %5 : vector<2x128xf32>
    %cst_5 = arith.constant 0.000000e+00 : f32
    %7 = vector.broadcast %cst_5 : f32 to vector<2x128xf32>
    %8 = arith.subf %7, %6 : vector<2x128xf32>
    %9 = math.exp %8 : vector<2x128xf32>
    %cst_6 = arith.constant 0.000000e+00 : f32
    %10 = vector.broadcast %cst_6 : f32 to vector<2x128xf32>
    %11 = arith.cmpf oge, %5, %10 : vector<2x128xf32>
    %cst_7 = arith.constant 1.000000e+00 : f32
    %12 = vector.broadcast %cst_7 : f32 to vector<2x128xf32>
    %13 = arith.select %11, %12, %9 : vector<2x128xi1>, vector<2x128xf32>
    %cst_8 = arith.constant 1.000000e+00 : f32
    %14 = vector.broadcast %cst_8 : f32 to vector<2x128xf32>
    %15 = arith.addf %14, %9 : vector<2x128xf32>
    %16 = tpu.reciprocal %15 {approx = true} : vector<2x128xf32> -> vector<2x128xf32>
    %17 = arith.mulf %13, %16 : vector<2x128xf32>
    %18 = arith.mulf %5, %17 : vector<2x128xf32>
    %19 = math.absf %18 : vector<2x128xf32>
    %cst_9 = arith.constant 0.000000e+00 : f32
    %20 = vector.broadcast %cst_9 : f32 to vector<2x128xf32>
    %21 = arith.subf %20, %19 : vector<2x128xf32>
    %22 = math.exp %21 : vector<2x128xf32>
    %cst_10 = arith.constant 0.000000e+00 : f32
    %23 = vector.broadcast %cst_10 : f32 to vector<2x128xf32>
    %24 = arith.cmpf oge, %18, %23 : vector<2x128xf32>
    %cst_11 = arith.constant 1.000000e+00 : f32
    %25 = vector.broadcast %cst_11 : f32 to vector<2x128xf32>
    %26 = arith.select %24, %25, %22 : vector<2x128xi1>, vector<2x128xf32>
    %cst_12 = arith.constant 1.000000e+00 : f32
    %27 = vector.broadcast %cst_12 : f32 to vector<2x128xf32>
    %28 = arith.addf %27, %22 : vector<2x128xf32>
    %29 = tpu.reciprocal %28 {approx = true} : vector<2x128xf32> -> vector<2x128xf32>
    %30 = arith.mulf %26, %29 : vector<2x128xf32>
    %c0_13 = arith.constant 0 : index
    %c0_14 = arith.constant 0 : index
    %31 = vector.load %arg4[%c0_13, %c0_14] : memref<2x128xf32, #tpu.memory_space<vmem>>, vector<2x128xf32>
    tpu.vector_store %arg4[%c0_13, %c0_14], %30 {strides = array<i32>} : memref<2x128xf32, #tpu.memory_space<vmem>>, vector<2x128xf32>,
    return
  }
  func.func @transform_0(%arg0: i32) -> (i32, i32) {
    %c0_i32 = arith.constant 0 : i32
    %c0_i32_0 = arith.constant 0 : i32
    %c0_i32_1 = arith.constant 0 : i32
    return %c0_i32, %c0_i32_0 : i32, i32
  }
  func.func @transform_1(%arg0: i32) -> (i32, i32) {
    %c0_i32 = arith.constant 0 : i32
    %c0_i32_0 = arith.constant 0 : i32
    return %c0_i32, %arg0 : i32, i32
  }
  func.func @transform_2(%arg0: i32) -> (i32, i32) {
    %c0_i32 = arith.constant 0 : i32
    %c0_i32_0 = arith.constant 0 : i32
    %c0_i32_1 = arith.constant 0 : i32
    return %c0_i32, %c0_i32_0 : i32, i32
  }
  func.func @transform_3(%arg0: i32) -> (i32, i32) {
    %c0_i32 = arith.constant 0 : i32
    %c0_i32_0 = arith.constant 0 : i32
    return %c0_i32, %arg0 : i32, i32
  }
}

module attributes {stable_mosaic.version = 11 : i64} {
  func.func @_conv_mm_kernel(%arg0: i32, %arg1: memref<54x32xbf16, #tpu.memory_space<vmem>>, %arg2: memref<32x32xbf16, #tpu.memory_space<vmem>>, %arg3: memref<54x1xf32, #tpu.memory_space<vmem>>, %arg4: memref<54x32xf32, #tpu.memory_space<vmem>>) attributes {dimension_semantics = [#tpu.dimension_semantics<parallel>], iteration_bounds = array<i64: 1>, scalar_prefetch = 0 : i64, scratch_operands = 0 : i64, tpu.core_type = #tpu.core_type<tc>, window_params = [{pipeline_mode = #tpu.pipeline_mode<synchronous>, transform_indices = @transform_0, window_bounds = array<i64: 54, 32>}, {transform_indices = @transform_1, window_bounds = array<i64: 32, 32>}, {pipeline_mode = #tpu.pipeline_mode<synchronous>, transform_indices = @transform_2, window_bounds = array<i64: 54, 1>}, {transform_indices = @transform_3, window_bounds = array<i64: 54, 32>}]} {
    %c0 = arith.constant 0 : index
    %c0_0 = arith.constant 0 : index
    %0 = vector.load %arg1[%c0, %c0_0] : memref<54x32xbf16, #tpu.memory_space<vmem>>, vector<54x32xbf16>
    %c0_1 = arith.constant 0 : index
    %c0_2 = arith.constant 0 : index
    %1 = vector.load %arg2[%c0_1, %c0_2] : memref<32x32xbf16, #tpu.memory_space<vmem>>, vector<32x32xbf16>
    %cst = arith.constant dense<0.000000e+00> : vector<54x32xf32>
    %2 = tpu.matmul %0, %1, %cst {dimension_numbers = #tpu.dot_dimension_numbers<[1], [0], [0], [1], [0, 0, 1, 1], [], []>} : vector<54x32xbf16>, vector<32x32xbf16>, vector<54x32xf32> -> vector<54x32xf32>
    %c0_3 = arith.constant 0 : index
    %c0_4 = arith.constant 0 : index
    %3 = vector.load %arg3[%c0_3, %c0_4] : memref<54x1xf32, #tpu.memory_space<vmem>>, vector<54x1xf32>
    %4 = vector.broadcast %3 : vector<54x1xf32> to vector<54x32xf32>
    %5 = arith.addf %2, %4 : vector<54x32xf32>
    %c0_5 = arith.constant 0 : index
    %c0_6 = arith.constant 0 : index
    %6 = vector.load %arg4[%c0_5, %c0_6] : memref<54x32xf32, #tpu.memory_space<vmem>>, vector<54x32xf32>
    tpu.vector_store %arg4[%c0_5, %c0_6], %5 {strides = array<i32>} : memref<54x32xf32, #tpu.memory_space<vmem>>, vector<54x32xf32>,
    return
  }
  func.func @transform_0(%arg0: i32) -> (i32, i32) {
    %c0_i32 = arith.constant 0 : i32
    %c0_i32_0 = arith.constant 0 : i32
    %c0_i32_1 = arith.constant 0 : i32
    return %c0_i32, %c0_i32_0 : i32, i32
  }
  func.func @transform_1(%arg0: i32) -> (i32, i32) {
    %c0_i32 = arith.constant 0 : i32
    %c0_i32_0 = arith.constant 0 : i32
    return %c0_i32, %arg0 : i32, i32
  }
  func.func @transform_2(%arg0: i32) -> (i32, i32) {
    %c0_i32 = arith.constant 0 : i32
    %c0_i32_0 = arith.constant 0 : i32
    %c0_i32_1 = arith.constant 0 : i32
    return %c0_i32, %c0_i32_0 : i32, i32
  }
  func.func @transform_3(%arg0: i32) -> (i32, i32) {
    %c0_i32 = arith.constant 0 : i32
    %c0_i32_0 = arith.constant 0 : i32
    return %c0_i32, %arg0 : i32, i32
  }
}

</mosaic_0001>

<llo_original>
// kernel: forward.9
$region0: #{forward.9}
  #allocation0 [shape = 'u32[]', space=smem, size = 0x4, offset = 0x4, fixed_abs, tag = 'smem constant byte address 0x4 - core index']
  #allocation1 [shape = 'u32[72,128]{1,0:T(1,128)}', space=vmem, size = 0x9000, scoped, tag = 'internal scratch']
  %s0 = inlined_call_operand.vmem [shape: bf16[8,27], index: 0, kind: input, shape index: {}]
  %s1 = inlined_call_operand.vmem [shape: bf16[27,128], index: 1, kind: input, shape index: {}]
  %s2 = inlined_call_operand.vmem [shape: f32[8,1], index: 2, kind: input, shape index: {}]
  %s3 = inlined_call_operand.vmem [shape: bf16[8,128], index: 3, kind: output, shape index: {}]
  %s4 = sld [smem:[#allocation0]]
  $region22: #{forward.9} parent=0
    _
  %s6 = ssub.s32 1, %s4
  %s7 = scalar_select 0, %s6, %s4
  // Predicated region
  $region2: #{forward.9} parent=0 // pred_check
    _
  $region3: #{forward.9} parent=0 // pred_check_branch
    %9 = sbr.rel (0) target = $region5
  $region4: #{forward.9} parent=0 // pred_region
    _
  $region5: #{forward.9} parent=0 // pred_fallthru
    _
  // Predicated region
  $region6: #{forward.9} parent=0 // pred_check
    _
  $region7: #{forward.9} parent=0 // pred_check_branch
    %11 = sbr.rel (0) target = $region9
  $region8: #{forward.9} parent=0 // pred_region
    _
  $region9: #{forward.9} parent=0 // pred_fallthru
    _
  // Predicated region
  $region10: #{forward.9} parent=0 // pred_check
    _
  $region11: #{forward.9} parent=0 // pred_check_branch
    %13 = sbr.rel (0) target = $region13
  $region12: #{forward.9} parent=0 // pred_region
    _
  $region13: #{forward.9} parent=0 // pred_fallthru
    _
  %v15 = vld [vmem:[%s0] sm:$0xf]
  %v16 = vld [vmem:[%s1] sm:$0xf]
  %v17 = vld [vmem:[%s1 + $0x4] sm:$0xf]
  %v18 = vld [vmem:[%s1 + $0x8] sm:$0xf]
  %v19 = vld [vmem:[%s1 + $0xc] sm:$0x3]
  %v20 = vld [vmem:[%s2] sm:$0xff]
  %22 = vset.pattern.permute.xlu0 0
  %23 = vperm.xlu0 %22, %v20
  %v24 = vpop.permute.xlu0 %23
  %v30 = vunpack.c.l.b16 %v16
  %v31 = vunpack.c.l.b16 %v17
  %v32 = vunpack.c.l.b16 %v18
  %v33 = vunpack.c.l.b16 %v19
  %v34 = vpack.c.b16 %v31, %v30
  %v35 = vpack.c.b16 %v33, %v32
  %vm37 = vcmask 220160
  %v39 = vsel %vm37, %v15, 0
  %vm41 = vcmask 1044480
  %vm42 = vcmask 1045504
  %v43 = vsel %vm41, 4294967295, 65535
  %v44 = vsel %vm42, %v43, 0
  %v46 = vand.u32 %v35, %v44
  %48 = vmatpush.bf16.msra.mxu0 0
  %49 = vmatpush.bf16.msra.mxu0 0
  %50 = vmatpush.bf16.msra.mxu0 0
  %51 = vmatpush.bf16.msra.mxu0 0
  %52 = vmatpush.bf16.msra.mxu0 0
  %53 = vmatpush.bf16.msra.mxu0 0
  %54 = vmatpush.bf16.msra.mxu0 %v46
  %55 = vmatpush.bf16.msra.mxu0 %v34
  %56 = vmatmul.bf16.gmra.mxu0 %v39
  %v57 = vpop.f32.mrf.mxu0
  %v58 = vadd.f32 %v24, %v57
  %v59 = vpop.f32.mrf.mxu0
  %60 = vdwg.mxu0
  %v61 = vand.u32 2147483647, %v58
  %v62 = vsub.f32 0.0, %v61
  %v63 = vmul.f32 %v62, 1.442695
  %v64 = vpow.pop %v63
  %vm65 = vcmp.ge.f32.partialorder %v58, 0.0
  %v66 = vsel %vm65, 1.0, %v64
  %v67 = vadd.f32 %v64, 1.0
  %v68 = vrcp.pop %v67
  %v69 = vmul.f32 %v66, %v68
  %v70 = vmul.f32 %v58, %v69
  %v71 = vpack.c.bf16 %v70, %v70
  %72 = vst [vmem:[%s3] sm:$0xf] %v71
  // Predicated region
  $region14: #{forward.9} parent=0 // pred_check
    _
  $region15: #{forward.9} parent=0 // pred_check_branch
    %74 = sbr.rel (0) target = $region17
  $region16: #{forward.9} parent=0 // pred_region
    _
  $region17: #{forward.9} parent=0 // pred_fallthru
    _
  // Predicated region
  $region18: #{forward.9} parent=0 // pred_check
    _
  $region19: #{forward.9} parent=0 // pred_check_branch
    %76 = sbr.rel (0) target = $region21
  $region20: #{forward.9} parent=0 // pred_region
    _
  $region21: #{forward.9} parent=0 // pred_fallthru
    _

// kernel: forward.10
$region0: #{forward.10}
  #allocation0 [shape = 'u32[]', space=smem, size = 0x4, offset = 0x4, fixed_abs, tag = 'smem constant byte address 0x4 - core index']
  #allocation1 [shape = 'u32[72,128]{1,0:T(1,128)}', space=vmem, size = 0x9000, scoped, tag = 'internal scratch']
  %s0 = inlined_call_operand.vmem [shape: bf16[16,72], index: 0, kind: input, shape index: {}]
  %s1 = inlined_call_operand.vmem [shape: bf16[72,32], index: 1, kind: input, shape index: {}]
  %s2 = inlined_call_operand.vmem [shape: f32[16,1], index: 2, kind: input, shape index: {}]
  %s3 = inlined_call_operand.vmem [shape: bf16[16,32], index: 3, kind: output, shape index: {}]
  %s4 = sld [smem:[#allocation0]]
  $region22: #{forward.10} parent=0
    _
  %s6 = ssub.s32 1, %s4
  %s7 = scalar_select 0, %s6, %s4
  // Predicated region
  $region2: #{forward.10} parent=0 // pred_check
    _
  $region3: #{forward.10} parent=0 // pred_check_branch
    %9 = sbr.rel (0) target = $region5
  $region4: #{forward.10} parent=0 // pred_region
    _
  $region5: #{forward.10} parent=0 // pred_fallthru
    _
  // Predicated region
  $region6: #{forward.10} parent=0 // pred_check
    _
  $region7: #{forward.10} parent=0 // pred_check_branch
    %11 = sbr.rel (0) target = $region9
  $region8: #{forward.10} parent=0 // pred_region
    _
  $region9: #{forward.10} parent=0 // pred_fallthru
    _
  // Predicated region
  $region10: #{forward.10} parent=0 // pred_check
    _
  $region11: #{forward.10} parent=0 // pred_check_branch
    %13 = sbr.rel (0) target = $region13
  $region12: #{forward.10} parent=0 // pred_region
    _
  $region13: #{forward.10} parent=0 // pred_fallthru
    _
  %v15 = vld [vmem:[%s0] sm:$0xf]
  %v16 = vld [vmem:[%s0 + $0x4] sm:$0xf]
  %v17 = vld [vmem:[%s1] sm:$0xf]
  %v18 = vld [vmem:[%s1 + $0x4] sm:$0xf]
  %v19 = vld [vmem:[%s1 + $0x8] sm:$0xf]
  %v20 = vld [vmem:[%s1 + $0xc] sm:$0xf]
  %v21 = vld [vmem:[%s1 + $0x10] sm:$0xf]
  %v22 = vld [vmem:[%s1 + $0x14] sm:$0xf]
  %v23 = vld [vmem:[%s1 + $0x18] sm:$0xf]
  %v24 = vld [vmem:[%s1 + $0x1c] sm:$0xf]
  %v25 = vld [vmem:[%s1 + $0x20] sm:$0xf]
  %v26 = vld [vmem:[%s2] sm:$0xff]
  %v27 = vld [vmem:[%s2 + $0x8] sm:$0xff]
  %29 = vset.pattern.permute.xlu0 0
  %30 = vperm.xlu0 %29, %v26
  %v31 = vpop.permute.xlu0 %30
  %34 = vset.pattern.permute.xlu0 0
  %35 = vperm.xlu0 %34, %v27
  %v36 = vpop.permute.xlu0 %35
  %v40 = vunpack.c.l.b16 %v15
  %v41 = vunpack.c.l.b16 %v16
  %v42 = vpack.c.b16 %v41, %v40
  %v52 = vunpack.c.l.b16 %v17
  %v53 = vunpack.c.l.b16 %v18
  %v54 = vunpack.c.l.b16 %v19
  %v55 = vunpack.c.l.b16 %v20
  %v56 = vunpack.c.l.b16 %v21
  %v57 = vunpack.c.l.b16 %v22
  %v58 = vunpack.c.l.b16 %v23
  %v59 = vunpack.c.l.b16 %v24
  %v60 = vunpack.c.l.b16 %v25
  %v61 = vpack.c.b16 %v53, %v52
  %v62 = vpack.c.b16 %v55, %v54
  %v63 = vpack.c.b16 %v57, %v56
  %v64 = vpack.c.b16 %v59, %v58
  %v65 = vpack.c.b16 %v60, %v60
  %vm70 = vcmask 588800
  %v72 = vsel %vm70, %v42, 0
  %vm74 = vcmask 1043456
  %v76 = vsel %vm74, %v65, 0
  %78 = vmatpush.bf16.msra.mxu0 0
  %79 = vmatpush.bf16.msra.mxu0 0
  %80 = vmatpush.bf16.msra.mxu0 0
  %81 = vmatpush.bf16.msra.mxu0 %v76
  %82 = vmatpush.bf16.msra.mxu0 %v64
  %83 = vmatpush.bf16.msra.mxu0 %v63
  %84 = vmatpush.bf16.msra.mxu0 %v62
  %85 = vmatpush.bf16.msra.mxu0 %v61
  %86 = vmatmul.bf16.gmra.mxu0 %v72
  %v87 = vpop.f32.mrf.mxu0
  %v88 = vadd.f32 %v31, %v87
  %v89 = vpop.f32.mrf.mxu0
  %v90 = vadd.f32 %v36, %v89
  %91 = vdwg.mxu0
  %v92 = vand.u32 2147483647, %v88
  %v93 = vand.u32 2147483647, %v90
  %v94 = vsub.f32 0.0, %v92
  %v95 = vsub.f32 0.0, %v93
  %v96 = vmul.f32 %v94, 1.442695
  %v97 = vpow.pop %v96
  %v98 = vmul.f32 %v95, 1.442695
  %v99 = vpow.pop %v98
  %vm100 = vcmp.ge.f32.partialorder %v88, 0.0
  %vm101 = vcmp.ge.f32.partialorder %v90, 0.0
  %v102 = vsel %vm100, 1.0, %v97
  %v103 = vsel %vm101, 1.0, %v99
  %v104 = vadd.f32 %v97, 1.0
  %v105 = vadd.f32 %v99, 1.0
  %v106 = vrcp.pop %v104
  %v107 = vrcp.pop %v105
  %v108 = vmul.f32 %v102, %v106
  %v109 = vmul.f32 %v103, %v107
  %v110 = vmul.f32 %v88, %v108
  %v111 = vmul.f32 %v90, %v109
  %v112 = vpack.c.bf16 %v110, %v110
  %v113 = vpack.c.bf16 %v111, %v111
  %vm114 = vcmask 257024
  %115 = vst.msk [vmem:[%s3] sm:$0xf] %vm114, %v112
  %116 = vst.msk [vmem:[%s3 + $0x4] sm:$0xf] %vm114, %v113
  // Predicated region
  $region14: #{forward.10} parent=0 // pred_check
    _
  $region15: #{forward.10} parent=0 // pred_check_branch
    %118 = sbr.rel (0) target = $region17
  $region16: #{forward.10} parent=0 // pred_region
    _
  $region17: #{forward.10} parent=0 // pred_fallthru
    _
  // Predicated region
  $region18: #{forward.10} parent=0 // pred_check
    _
  $region19: #{forward.10} parent=0 // pred_check_branch
    %120 = sbr.rel (0) target = $region21
  $region20: #{forward.10} parent=0 // pred_region
    _
  $region21: #{forward.10} parent=0 // pred_fallthru
    _

// kernel: forward.11
$region0: #{forward.11}
  #allocation0 [shape = 'u32[]', space=smem, size = 0x4, offset = 0x4, fixed_abs, tag = 'smem constant byte address 0x4 - core index']
  #allocation1 [shape = 'u32[72,128]{1,0:T(1,128)}', space=vmem, size = 0x9000, scoped, tag = 'internal scratch']
  %s0 = inlined_call_operand.vmem [shape: bf16[16,144], index: 0, kind: input, shape index: {}]
  %s1 = inlined_call_operand.vmem [shape: bf16[144,32], index: 1, kind: input, shape index: {}]
  %s2 = inlined_call_operand.vmem [shape: f32[16,1], index: 2, kind: input, shape index: {}]
  %s3 = inlined_call_operand.vmem [shape: bf16[16,32], index: 3, kind: output, shape index: {}]
  %s4 = sld [smem:[#allocation0]]
  $region22: #{forward.11} parent=0
    _
  %s6 = ssub.s32 1, %s4
  %s7 = scalar_select 0, %s6, %s4
  // Predicated region
  $region2: #{forward.11} parent=0 // pred_check
    _
  $region3: #{forward.11} parent=0 // pred_check_branch
    %9 = sbr.rel (0) target = $region5
  $region4: #{forward.11} parent=0 // pred_region
    _
  $region5: #{forward.11} parent=0 // pred_fallthru
    _
  // Predicated region
  $region6: #{forward.11} parent=0 // pred_check
    _
  $region7: #{forward.11} parent=0 // pred_check_branch
    %11 = sbr.rel (0) target = $region9
  $region8: #{forward.11} parent=0 // pred_region
    _
  $region9: #{forward.11} parent=0 // pred_fallthru
    _
  // Predicated region
  $region10: #{forward.11} parent=0 // pred_check
    _
  $region11: #{forward.11} parent=0 // pred_check_branch
    %13 = sbr.rel (0) target = $region13
  $region12: #{forward.11} parent=0 // pred_region
    _
  $region13: #{forward.11} parent=0 // pred_fallthru
    _
  %v15 = vld [vmem:[%s0] sm:$0xff]
  %v16 = vld [vmem:[%s0 + $0x8] sm:$0xff]
  %v17 = vld [vmem:[%s1] sm:$0xf]
  %v18 = vld [vmem:[%s1 + $0x4] sm:$0xf]
  %v19 = vld [vmem:[%s1 + $0x8] sm:$0xf]
  %v20 = vld [vmem:[%s1 + $0xc] sm:$0xf]
  %v21 = vld [vmem:[%s1 + $0x10] sm:$0xf]
  %v22 = vld [vmem:[%s1 + $0x14] sm:$0xf]
  %v23 = vld [vmem:[%s1 + $0x18] sm:$0xf]
  %v24 = vld [vmem:[%s1 + $0x1c] sm:$0xf]
  %v25 = vld [vmem:[%s1 + $0x20] sm:$0xf]
  %v26 = vld [vmem:[%s1 + $0x24] sm:$0xf]
  %v27 = vld [vmem:[%s1 + $0x28] sm:$0xf]
  %v28 = vld [vmem:[%s1 + $0x2c] sm:$0xf]
  %v29 = vld [vmem:[%s1 + $0x30] sm:$0xf]
  %v30 = vld [vmem:[%s1 + $0x34] sm:$0xf]
  %v31 = vld [vmem:[%s1 + $0x38] sm:$0xf]
  %v32 = vld [vmem:[%s1 + $0x3c] sm:$0xf]
  %v33 = vld [vmem:[%s1 + $0x40] sm:$0xf]
  %v34 = vld [vmem:[%s1 + $0x44] sm:$0xf]
  %v35 = vld [vmem:[%s2] sm:$0xff]
  %v36 = vld [vmem:[%s2 + $0x8] sm:$0xff]
  %38 = vset.pattern.permute.xlu0 0
  %39 = vperm.xlu0 %38, %v35
  %v40 = vpop.permute.xlu0 %39
  %43 = vset.pattern.permute.xlu0 0
  %44 = vperm.xlu0 %43, %v36
  %v45 = vpop.permute.xlu0 %44
  %v49 = vunpack.c.l.b16 %v15
  %v50 = vunpack.c.h.b16 %v15
  %v51 = vunpack.c.l.b16 %v16
  %v52 = vunpack.c.h.b16 %v16
  %v53 = vpack.c.b16 %v51, %v49
  %v54 = vpack.c.b16 %v52, %v50
  %v74 = vunpack.c.l.b16 %v17
  %v75 = vunpack.c.l.b16 %v18
  %v76 = vunpack.c.l.b16 %v19
  %v77 = vunpack.c.l.b16 %v20
  %v78 = vunpack.c.l.b16 %v21
  %v79 = vunpack.c.l.b16 %v22
  %v80 = vunpack.c.l.b16 %v23
  %v81 = vunpack.c.l.b16 %v24
  %v82 = vunpack.c.l.b16 %v25
  %v83 = vunpack.c.l.b16 %v26
  %v84 = vunpack.c.l.b16 %v27
  %v85 = vunpack.c.l.b16 %v28
  %v86 = vunpack.c.l.b16 %v29
  %v87 = vunpack.c.l.b16 %v30
  %v88 = vunpack.c.l.b16 %v31
  %v89 = vunpack.c.l.b16 %v32
  %v90 = vunpack.c.l.b16 %v33
  %v91 = vunpack.c.l.b16 %v34
  %v92 = vpack.c.b16 %v75, %v74
  %v93 = vpack.c.b16 %v77, %v76
  %v94 = vpack.c.b16 %v79, %v78
  %v95 = vpack.c.b16 %v81, %v80
  %v96 = vpack.c.b16 %v83, %v82
  %v97 = vpack.c.b16 %v85, %v84
  %v98 = vpack.c.b16 %v87, %v86
  %v99 = vpack.c.b16 %v89, %v88
  %v100 = vpack.c.b16 %v91, %v90
  %vm110 = vcmask 130048
  %v112 = vsel %vm110, %v54, 0
  %114 = vmatpush.bf16.msra.mxu0 %v99
  %115 = vmatpush.bf16.msra.mxu0 %v98
  %116 = vmatpush.bf16.msra.mxu0 %v97
  %117 = vmatpush.bf16.msra.mxu0 %v96
  %118 = vmatpush.bf16.msra.mxu0 %v95
  %119 = vmatpush.bf16.msra.mxu0 %v94
  %120 = vmatpush.bf16.msra.mxu0 %v93
  %121 = vmatpush.bf16.msra.mxu0 %v92
  %122 = vmatmul.bf16.gmra.mxu0 %v53
  %v123 = vpop.f32.mrf.mxu0
  %v124 = vadd.f32 %v40, %v123
  %v125 = vpop.f32.mrf.mxu0
  %v126 = vadd.f32 %v45, %v125
  %127 = vdwg.mxu0
  %128 = vmatpush.bf16.msra.mxu0 0
  %129 = vmatpush.bf16.msra.mxu0 0
  %130 = vmatpush.bf16.msra.mxu0 0
  %131 = vmatpush.bf16.msra.mxu0 0
  %132 = vmatpush.bf16.msra.mxu0 0
  %133 = vmatpush.bf16.msra.mxu0 0
  %134 = vmatpush.bf16.msra.mxu0 0
  %135 = vmatpush.bf16.msra.mxu0 %v100
  %136 = vmatmul.bf16.gmra.mxu0 %v112
  %v137 = vpop.f32.mrf.mxu0
  %v138 = vadd.f32 %v124, %v137
  %v139 = vpop.f32.mrf.mxu0
  %v140 = vadd.f32 %v126, %v139
  %141 = vdwg.mxu0
  %v142 = vand.u32 2147483647, %v138
  %v143 = vand.u32 2147483647, %v140
  %v144 = vsub.f32 0.0, %v142
  %v145 = vsub.f32 0.0, %v143
  %v146 = vmul.f32 %v144, 1.442695
  %v147 = vpow.pop %v146
  %v148 = vmul.f32 %v145, 1.442695
  %v149 = vpow.pop %v148
  %vm150 = vcmp.ge.f32.partialorder %v138, 0.0
  %vm151 = vcmp.ge.f32.partialorder %v140, 0.0
  %v152 = vsel %vm150, 1.0, %v147
  %v153 = vsel %vm151, 1.0, %v149
  %v154 = vadd.f32 %v147, 1.0
  %v155 = vadd.f32 %v149, 1.0
  %v156 = vrcp.pop %v154
  %v157 = vrcp.pop %v155
  %v158 = vmul.f32 %v152, %v156
  %v159 = vmul.f32 %v153, %v157
  %v160 = vmul.f32 %v138, %v158
  %v161 = vmul.f32 %v140, %v159
  %v162 = vpack.c.bf16 %v160, %v160
  %v163 = vpack.c.bf16 %v161, %v161
  %vm164 = vcmask 257024
  %165 = vst.msk [vmem:[%s3] sm:$0xf] %vm164, %v162
  %166 = vst.msk [vmem:[%s3 + $0x4] sm:$0xf] %vm164, %v163
  // Predicated region
  $region14: #{forward.11} parent=0 // pred_check
    _
  $region15: #{forward.11} parent=0 // pred_check_branch
    %168 = sbr.rel (0) target = $region17
  $region16: #{forward.11} parent=0 // pred_region
    _
  $region17: #{forward.11} parent=0 // pred_fallthru
    _
  // Predicated region
  $region18: #{forward.11} parent=0 // pred_check
    _
  $region19: #{forward.11} parent=0 // pred_check_branch
    %170 = sbr.rel (0) target = $region21
  $region20: #{forward.11} parent=0 // pred_region
    _
  $region21: #{forward.11} parent=0 // pred_fallthru
    _

// kernel: forward.16
$region0: #{forward.16}
  #allocation0 [shape = 'u32[]', space=smem, size = 0x4, offset = 0x4, fixed_abs, tag = 'smem constant byte address 0x4 - core index']
  #allocation1 [shape = 'u32[72,128]{1,0:T(1,128)}', space=vmem, size = 0x9000, scoped, tag = 'internal scratch']
  %s0 = inlined_call_operand.vmem [shape: bf16[8,72], index: 0, kind: input, shape index: {}]
  %s1 = inlined_call_operand.vmem [shape: bf16[72,128], index: 1, kind: input, shape index: {}]
  %s2 = inlined_call_operand.vmem [shape: f32[8,1], index: 2, kind: input, shape index: {}]
  %s3 = inlined_call_operand.vmem [shape: bf16[8,128], index: 3, kind: output, shape index: {}]
  %s4 = sld [smem:[#allocation0]]
  $region22: #{forward.16} parent=0
    _
  %s6 = ssub.s32 1, %s4
  %s7 = scalar_select 0, %s6, %s4
  // Predicated region
  $region2: #{forward.16} parent=0 // pred_check
    _
  $region3: #{forward.16} parent=0 // pred_check_branch
    %9 = sbr.rel (0) target = $region5
  $region4: #{forward.16} parent=0 // pred_region
    _
  $region5: #{forward.16} parent=0 // pred_fallthru
    _
  // Predicated region
  $region6: #{forward.16} parent=0 // pred_check
    _
  $region7: #{forward.16} parent=0 // pred_check_branch
    %11 = sbr.rel (0) target = $region9
  $region8: #{forward.16} parent=0 // pred_region
    _
  $region9: #{forward.16} parent=0 // pred_fallthru
    _
  // Predicated region
  $region10: #{forward.16} parent=0 // pred_check
    _
  $region11: #{forward.16} parent=0 // pred_check_branch
    %13 = sbr.rel (0) target = $region13
  $region12: #{forward.16} parent=0 // pred_region
    _
  $region13: #{forward.16} parent=0 // pred_fallthru
    _
  %v15 = vld [vmem:[%s0] sm:$0xf]
  %v16 = vld [vmem:[%s1] sm:$0xf]
  %v17 = vld [vmem:[%s1 + $0x4] sm:$0xf]
  %v18 = vld [vmem:[%s1 + $0x8] sm:$0xf]
  %v19 = vld [vmem:[%s1 + $0xc] sm:$0xf]
  %v20 = vld [vmem:[%s1 + $0x10] sm:$0xf]
  %v21 = vld [vmem:[%s1 + $0x14] sm:$0xf]
  %v22 = vld [vmem:[%s1 + $0x18] sm:$0xf]
  %v23 = vld [vmem:[%s1 + $0x1c] sm:$0xf]
  %v24 = vld [vmem:[%s1 + $0x20] sm:$0xf]
  %v25 = vld [vmem:[%s2] sm:$0xff]
  %27 = vset.pattern.permute.xlu0 0
  %28 = vperm.xlu0 %27, %v25
  %v29 = vpop.permute.xlu0 %28
  %v40 = vunpack.c.l.b16 %v16
  %v41 = vunpack.c.l.b16 %v17
  %v42 = vunpack.c.l.b16 %v18
  %v43 = vunpack.c.l.b16 %v19
  %v44 = vunpack.c.l.b16 %v20
  %v45 = vunpack.c.l.b16 %v21
  %v46 = vunpack.c.l.b16 %v22
  %v47 = vunpack.c.l.b16 %v23
  %v48 = vunpack.c.l.b16 %v24
  %v49 = vpack.c.b16 %v41, %v40
  %v50 = vpack.c.b16 %v43, %v42
  %v51 = vpack.c.b16 %v45, %v44
  %v52 = vpack.c.b16 %v47, %v46
  %v53 = vpack.c.b16 %v48, %v48
  %vm58 = vcmask 588800
  %v60 = vsel %vm58, %v15, 0
  %vm62 = vcmask 1043456
  %v64 = vsel %vm62, %v53, 0
  %66 = vmatpush.bf16.msra.mxu0 0
  %67 = vmatpush.bf16.msra.mxu0 0
  %68 = vmatpush.bf16.msra.mxu0 0
  %69 = vmatpush.bf16.msra.mxu0 %v64
  %70 = vmatpush.bf16.msra.mxu0 %v52
  %71 = vmatpush.bf16.msra.mxu0 %v51
  %72 = vmatpush.bf16.msra.mxu0 %v50
  %73 = vmatpush.bf16.msra.mxu0 %v49
  %74 = vmatmul.bf16.gmra.mxu0 %v60
  %v75 = vpop.f32.mrf.mxu0
  %v76 = vadd.f32 %v29, %v75
  %v77 = vpop.f32.mrf.mxu0
  %78 = vdwg.mxu0
  %v79 = vand.u32 2147483647, %v76
  %v80 = vsub.f32 0.0, %v79
  %v81 = vmul.f32 %v80, 1.442695
  %v82 = vpow.pop %v81
  %vm83 = vcmp.ge.f32.partialorder %v76, 0.0
  %v84 = vsel %vm83, 1.0, %v82
  %v85 = vadd.f32 %v82, 1.0
  %v86 = vrcp.pop %v85
  %v87 = vmul.f32 %v84, %v86
  %v88 = vmul.f32 %v76, %v87
  %v89 = vpack.c.bf16 %v88, %v88
  %90 = vst [vmem:[%s3] sm:$0xf] %v89
  // Predicated region
  $region14: #{forward.16} parent=0 // pred_check
    _
  $region15: #{forward.16} parent=0 // pred_check_branch
    %92 = sbr.rel (0) target = $region17
  $region16: #{forward.16} parent=0 // pred_region
    _
  $region17: #{forward.16} parent=0 // pred_fallthru
    _
  // Predicated region
  $region18: #{forward.16} parent=0 // pred_check
    _
  $region19: #{forward.16} parent=0 // pred_check_branch
    %94 = sbr.rel (0) target = $region21
  $region20: #{forward.16} parent=0 // pred_region
    _
  $region21: #{forward.16} parent=0 // pred_fallthru
    _

// kernel: forward.17
$region0: #{forward.17}
  #allocation0 [shape = 'u32[]', space=smem, size = 0x4, offset = 0x4, fixed_abs, tag = 'smem constant byte address 0x4 - core index']
  #allocation1 [shape = 'u32[72,128]{1,0:T(1,128)}', space=vmem, size = 0x9000, scoped, tag = 'internal scratch']
  %s0 = inlined_call_operand.vmem [shape: bf16[2,72], index: 0, kind: input, shape index: {}]
  %s1 = inlined_call_operand.vmem [shape: bf16[72,128], index: 1, kind: input, shape index: {}]
  %s2 = inlined_call_operand.vmem [shape: f32[2,1], index: 2, kind: input, shape index: {}]
  %s3 = inlined_call_operand.vmem [shape: f32[2,128], index: 3, kind: output, shape index: {}]
  %s4 = sld [smem:[#allocation0]]
  $region22: #{forward.17} parent=0
    _
  %s6 = ssub.s32 1, %s4
  %s7 = scalar_select 0, %s6, %s4
  // Predicated region
  $region2: #{forward.17} parent=0 // pred_check
    _
  $region3: #{forward.17} parent=0 // pred_check_branch
    %9 = sbr.rel (0) target = $region5
  $region4: #{forward.17} parent=0 // pred_region
    _
  $region5: #{forward.17} parent=0 // pred_fallthru
    _
  // Predicated region
  $region6: #{forward.17} parent=0 // pred_check
    _
  $region7: #{forward.17} parent=0 // pred_check_branch
    %11 = sbr.rel (0) target = $region9
  $region8: #{forward.17} parent=0 // pred_region
    _
  $region9: #{forward.17} parent=0 // pred_fallthru
    _
  // Predicated region
  $region10: #{forward.17} parent=0 // pred_check
    _
  $region11: #{forward.17} parent=0 // pred_check_branch
    %13 = sbr.rel (0) target = $region13
  $region12: #{forward.17} parent=0 // pred_region
    _
  $region13: #{forward.17} parent=0 // pred_fallthru
    _
  %v15 = vld [vmem:[%s0] sm:$0x1]
  %v16 = vld [vmem:[%s1] sm:$0xf]
  %v17 = vld [vmem:[%s1 + $0x4] sm:$0xf]
  %v18 = vld [vmem:[%s1 + $0x8] sm:$0xf]
  %v19 = vld [vmem:[%s1 + $0xc] sm:$0xf]
  %v20 = vld [vmem:[%s1 + $0x10] sm:$0xf]
  %v21 = vld [vmem:[%s1 + $0x14] sm:$0xf]
  %v22 = vld [vmem:[%s1 + $0x18] sm:$0xf]
  %v23 = vld [vmem:[%s1 + $0x1c] sm:$0xf]
  %v24 = vld [vmem:[%s1 + $0x20] sm:$0xf]
  %v25 = vld [vmem:[%s2] sm:$0x3]
  %27 = vset.pattern.permute.xlu0 0
  %28 = vperm.xlu0 %27, %v25
  %v29 = vpop.permute.xlu0 %28
  %v40 = vunpack.c.l.b16 %v16
  %v41 = vunpack.c.l.b16 %v17
  %v42 = vunpack.c.l.b16 %v18
  %v43 = vunpack.c.l.b16 %v19
  %v44 = vunpack.c.l.b16 %v20
  %v45 = vunpack.c.l.b16 %v21
  %v46 = vunpack.c.l.b16 %v22
  %v47 = vunpack.c.l.b16 %v23
  %v48 = vunpack.c.l.b16 %v24
  %v49 = vpack.c.b16 %v41, %v40
  %v50 = vpack.c.b16 %v43, %v42
  %v51 = vpack.c.b16 %v45, %v44
  %v52 = vpack.c.b16 %v47, %v46
  %v53 = vpack.c.b16 %v48, %v48
  %vm58 = vcmask 588800
  %v60 = vsel %vm58, %v15, 0
  %vm62 = vcmask 1043456
  %v64 = vsel %vm62, %v53, 0
  %66 = vmatpush.bf16.msra.mxu0 0
  %67 = vmatpush.bf16.msra.mxu0 0
  %68 = vmatpush.bf16.msra.mxu0 0
  %69 = vmatpush.bf16.msra.mxu0 %v64
  %70 = vmatpush.bf16.msra.mxu0 %v52
  %71 = vmatpush.bf16.msra.mxu0 %v51
  %72 = vmatpush.bf16.msra.mxu0 %v50
  %73 = vmatpush.bf16.msra.mxu0 %v49
  %74 = vmatmul.bf16.gmra.mxu0 %v60
  %v75 = vpop.f32.mrf.mxu0
  %v76 = vadd.f32 %v29, %v75
  %v77 = vpop.f32.mrf.mxu0
  %78 = vdwg.mxu0
  %v79 = vand.u32 2147483647, %v76
  %v80 = vsub.f32 0.0, %v79
  %v81 = vmul.f32 %v80, 1.442695
  %v82 = vpow.pop %v81
  %vm83 = vcmp.ge.f32.partialorder %v76, 0.0
  %v84 = vsel %vm83, 1.0, %v82
  %v85 = vadd.f32 %v82, 1.0
  %v86 = vrcp.pop %v85
  %v87 = vmul.f32 %v84, %v86
  %v88 = vmul.f32 %v76, %v87
  %v89 = vand.u32 2147483647, %v88
  %v90 = vsub.f32 0.0, %v89
  %v91 = vmul.f32 %v90, 1.442695
  %v92 = vpow.pop %v91
  %vm93 = vcmp.ge.f32.partialorder %v88, 0.0
  %v94 = vsel %vm93, 1.0, %v92
  %v95 = vadd.f32 %v92, 1.0
  %v96 = vrcp.pop %v95
  %v97 = vmul.f32 %v94, %v96
  %98 = vst [vmem:[%s3] sm:$0x3] %v97
  // Predicated region
  $region14: #{forward.17} parent=0 // pred_check
    _
  $region15: #{forward.17} parent=0 // pred_check_branch
    %100 = sbr.rel (0) target = $region17
  $region16: #{forward.17} parent=0 // pred_region
    _
  $region17: #{forward.17} parent=0 // pred_fallthru
    _
  // Predicated region
  $region18: #{forward.17} parent=0 // pred_check
    _
  $region19: #{forward.17} parent=0 // pred_check_branch
    %102 = sbr.rel (0) target = $region21
  $region20: #{forward.17} parent=0 // pred_region
    _
  $region21: #{forward.17} parent=0 // pred_fallthru
    _

// kernel: forward.12
$region0: #{forward.12}
  #allocation0 [shape = 'u32[]', space=smem, size = 0x4, offset = 0x4, fixed_abs, tag = 'smem constant byte address 0x4 - core index']
  #allocation1 [shape = 'u32[72,128]{1,0:T(1,128)}', space=vmem, size = 0x9000, scoped, tag = 'internal scratch']
  %s0 = inlined_call_operand.vmem [shape: bf16[54,32], index: 0, kind: input, shape index: {}]
  %s1 = inlined_call_operand.vmem [shape: bf16[32,32], index: 1, kind: input, shape index: {}]
  %s2 = inlined_call_operand.vmem [shape: f32[54,1], index: 2, kind: input, shape index: {}]
  %s3 = inlined_call_operand.vmem [shape: f32[54,32], index: 3, kind: output, shape index: {}]
  %s4 = sld [smem:[#allocation0]]
  $region22: #{forward.12} parent=0
    _
  %s6 = ssub.s32 1, %s4
  %s7 = scalar_select 0, %s6, %s4
  // Predicated region
  $region2: #{forward.12} parent=0 // pred_check
    _
  $region3: #{forward.12} parent=0 // pred_check_branch
    %9 = sbr.rel (0) target = $region5
  $region4: #{forward.12} parent=0 // pred_region
    _
  $region5: #{forward.12} parent=0 // pred_fallthru
    _
  // Predicated region
  $region6: #{forward.12} parent=0 // pred_check
    _
  $region7: #{forward.12} parent=0 // pred_check_branch
    %11 = sbr.rel (0) target = $region9
  $region8: #{forward.12} parent=0 // pred_region
    _
  $region9: #{forward.12} parent=0 // pred_fallthru
    _
  // Predicated region
  $region10: #{forward.12} parent=0 // pred_check
    _
  $region11: #{forward.12} parent=0 // pred_check_branch
    %13 = sbr.rel (0) target = $region13
  $region12: #{forward.12} parent=0 // pred_region
    _
  $region13: #{forward.12} parent=0 // pred_fallthru
    _
  %v15 = vld [vmem:[%s0] sm:$0xf]
  %v16 = vld [vmem:[%s0 + $0x4] sm:$0xf]
  %v17 = vld [vmem:[%s0 + $0x8] sm:$0xf]
  %v18 = vld [vmem:[%s0 + $0xc] sm:$0xf]
  %v19 = vld [vmem:[%s0 + $0x10] sm:$0xf]
  %v20 = vld [vmem:[%s0 + $0x14] sm:$0xf]
  %v21 = vld [vmem:[%s0 + $0x18] sm:$0x7]
  %v22 = vld [vmem:[%s1] sm:$0xf]
  %v23 = vld [vmem:[%s1 + $0x4] sm:$0xf]
  %v24 = vld [vmem:[%s1 + $0x8] sm:$0xf]
  %v25 = vld [vmem:[%s1 + $0xc] sm:$0xf]
  %v26 = vld [vmem:[%s2] sm:$0xff]
  %v27 = vld [vmem:[%s2 + $0x8] sm:$0xff]
  %v28 = vld [vmem:[%s2 + $0x10] sm:$0xff]
  %v29 = vld [vmem:[%s2 + $0x18] sm:$0xff]
  %v30 = vld [vmem:[%s2 + $0x20] sm:$0xff]
  %v31 = vld [vmem:[%s2 + $0x28] sm:$0xff]
  %v32 = vld [vmem:[%s2 + $0x30] sm:$0x3f]
  %34 = vset.pattern.permute.xlu0 0
  %35 = vperm.xlu0 %34, %v26
  %v36 = vpop.permute.xlu0 %35
  %39 = vset.pattern.permute.xlu0 0
  %40 = vperm.xlu0 %39, %v27
  %v41 = vpop.permute.xlu0 %40
  %44 = vset.pattern.permute.xlu0 0
  %45 = vperm.xlu0 %44, %v28
  %v46 = vpop.permute.xlu0 %45
  %49 = vset.pattern.permute.xlu0 0
  %50 = vperm.xlu0 %49, %v29
  %v51 = vpop.permute.xlu0 %50
  %54 = vset.pattern.permute.xlu0 0
  %55 = vperm.xlu0 %54, %v30
  %v56 = vpop.permute.xlu0 %55
  %59 = vset.pattern.permute.xlu0 0
  %60 = vperm.xlu0 %59, %v31
  %v61 = vpop.permute.xlu0 %60
  %64 = vset.pattern.permute.xlu0 0
  %65 = vperm.xlu0 %64, %v32
  %v66 = vpop.permute.xlu0 %65
  %v75 = vunpack.c.l.b16 %v15
  %v76 = vunpack.c.l.b16 %v16
  %v77 = vunpack.c.l.b16 %v17
  %v78 = vunpack.c.l.b16 %v18
  %v79 = vunpack.c.l.b16 %v19
  %v80 = vunpack.c.l.b16 %v20
  %v81 = vunpack.c.l.b16 %v21
  %v82 = vpack.c.b16 %v76, %v75
  %v83 = vpack.c.b16 %v78, %v77
  %v84 = vpack.c.b16 %v80, %v79
  %v85 = vpack.c.b16 %v81, %v81
  %v90 = vunpack.c.l.b16 %v22
  %v91 = vunpack.c.l.b16 %v23
  %v92 = vunpack.c.l.b16 %v24
  %v93 = vunpack.c.l.b16 %v25
  %v94 = vpack.c.b16 %v91, %v90
  %v95 = vpack.c.b16 %v93, %v92
  %vm98 = vcmask 261120
  %v100 = vsel %vm98, %v82, 0
  %v103 = vsel %vm98, %v83, 0
  %v106 = vsel %vm98, %v84, 0
  %v109 = vsel %vm98, %v85, 0
  %111 = vmatpush.bf16.msra.mxu0 0
  %112 = vmatpush.bf16.msra.mxu0 0
  %113 = vmatpush.bf16.msra.mxu0 0
  %114 = vmatpush.bf16.msra.mxu0 0
  %115 = vmatpush.bf16.msra.mxu0 0
  %116 = vmatpush.bf16.msra.mxu0 0
  %117 = vmatpush.bf16.msra.mxu0 %v95
  %118 = vmatpush.bf16.msra.mxu0 %v94
  %119 = vmatmul.bf16.gmra.mxu0 %v100
  %v120 = vpop.f32.mrf.mxu0
  %v121 = vadd.f32 %v36, %v120
  %v122 = vpop.f32.mrf.mxu0
  %v123 = vadd.f32 %v41, %v122
  %124 = vmatmul.bf16.gmra.mxu0 %v103
  %v125 = vpop.f32.mrf.mxu0
  %v126 = vadd.f32 %v46, %v125
  %v127 = vpop.f32.mrf.mxu0
  %v128 = vadd.f32 %v51, %v127
  %129 = vmatmul.bf16.gmra.mxu0 %v106
  %v130 = vpop.f32.mrf.mxu0
  %v131 = vadd.f32 %v56, %v130
  %v132 = vpop.f32.mrf.mxu0
  %v133 = vadd.f32 %v61, %v132
  %134 = vmatmul.bf16.gmra.mxu0 %v109
  %v135 = vpop.f32.mrf.mxu0
  %v136 = vadd.f32 %v66, %v135
  %v137 = vpop.f32.mrf.mxu0
  %138 = vdwg.mxu0
  %139 = vst.msk [vmem:[%s3] sm:$0xff] %vm98, %v121
  %140 = vst.msk [vmem:[%s3 + $0x8] sm:$0xff] %vm98, %v123
  %141 = vst.msk [vmem:[%s3 + $0x10] sm:$0xff] %vm98, %v126
  %142 = vst.msk [vmem:[%s3 + $0x18] sm:$0xff] %vm98, %v128
  %143 = vst.msk [vmem:[%s3 + $0x20] sm:$0xff] %vm98, %v131
  %144 = vst.msk [vmem:[%s3 + $0x28] sm:$0xff] %vm98, %v133
  %vm145 = vcmask 259072
  %146 = vst.msk [vmem:[%s3 + $0x30] sm:$0x3f] %vm145, %v136
  // Predicated region
  $region14: #{forward.12} parent=0 // pred_check
    _
  $region15: #{forward.12} parent=0 // pred_check_branch
    %148 = sbr.rel (0) target = $region17
  $region16: #{forward.12} parent=0 // pred_region
    _
  $region17: #{forward.12} parent=0 // pred_fallthru
    _
  // Predicated region
  $region18: #{forward.12} parent=0 // pred_check
    _
  $region19: #{forward.12} parent=0 // pred_check_branch
    %150 = sbr.rel (0) target = $region21
  $region20: #{forward.12} parent=0 // pred_region
    _
  $region21: #{forward.12} parent=0 // pred_fallthru
    _

</llo_original>
